<compile_context>
chip_gen: v7x
topology: tpu7x:2x2x1
jax: 0.10.0
libtpu: 0.0.40
codegen_flags: <defaults>
</compile_context>

<pallas_src>
import jax
import jax.numpy as jnp
from jax.experimental import pallas as pl
from jax.experimental.pallas import tpu as pltpu


def _global_pose_kernel(r_ref, t_ref, init_ref, out_ref):
    """All-cameras pose composition: out[cam] = local_c2w(cam) @ init_c2w[cam].

    r_ref: (4, Npad), t_ref: (3, Npad), init_ref/out_ref: (16, Npad).
    Camera axis is the lane axis; everything is (rows, Npad) VPU math.
    """
    qr = r_ref[0:1, :]
    qi = r_ref[1:2, :]
    qj = r_ref[2:3, :]
    qk = r_ref[3:4, :]
    tx = t_ref[0:1, :]
    ty = t_ref[1:2, :]
    tz = t_ref[2:3, :]

    # One lane-vector reciprocal for the whole batch (padded lanes hold the
    # identity quaternion, so the norm is never zero).
    two_s = 2.0 / (qr * qr + qi * qi + qj * qj + qk * qk)

    c00 = 1.0 - two_s * (qj * qj + qk * qk)
    c01 = two_s * (qi * qj - qk * qr)
    c02 = two_s * (qi * qk + qj * qr)
    c10 = two_s * (qi * qj + qk * qr)
    c11 = 1.0 - two_s * (qi * qi + qk * qk)
    c12 = two_s * (qj * qk - qi * qr)
    c20 = two_s * (qi * qk - qj * qr)
    c21 = two_s * (qj * qk + qi * qr)
    c22 = 1.0 - two_s * (qi * qi + qj * qj)

    ini = init_ref[...]           # (16, Npad)
    ini0 = ini[0:4, :]            # init row 0 (4 columns on sublanes) per camera
    ini1 = ini[4:8, :]
    ini2 = ini[8:12, :]
    ini3 = ini[12:16, :]

    # out[i, :] = local[i,0]*init[0,:] + local[i,1]*init[1,:]
    #           + local[i,2]*init[2,:] + local[i,3]*init[3,:]
    # local row 3 is [0,0,0,1] -> out row 3 == init row 3.
    out_ref[0:4, :] = c00 * ini0 + c01 * ini1 + c02 * ini2 + tx * ini3
    out_ref[4:8, :] = c10 * ini0 + c11 * ini1 + c12 * ini2 + ty * ini3
    out_ref[8:12, :] = c20 * ini0 + c21 * ini1 + c22 * ini2 + tz * ini3
    out_ref[12:16, :] = ini3


def _round_up(x, m):
    return ((x + m - 1) // m) * m


@jax.jit
def global_pose_all(r, t, init_c2w):
    """Compute poses for all cameras in one pallas_call.

    r: (N-1, 4) f32 quaternions [w,x,y,z] (or None / empty when N == 1)
    t: (N-1, 3) f32 translations         (or None / empty when N == 1)
    init_c2w: (N, 4, 4) f32
    Returns (N, 4, 4) f32: forward(cam) for cam in range(N), i.e. get_pose().
    """
    num_cams = init_c2w.shape[0]
    n_pad = _round_up(max(num_cams, 1), 128)  # lane-dense slab width

    # Identity quaternion / zero translation everywhere (covers cam 0 and the
    # lane padding), then fill columns 1..N-1 with the learnable parameters.
    r_full = jnp.zeros((4, n_pad), jnp.float32).at[0, :].set(1.0)
    t_full = jnp.zeros((3, n_pad), jnp.float32)
    if num_cams > 1 and r is not None and t is not None:
        r_full = r_full.at[:, 1:num_cams].set(r.T.astype(jnp.float32))
        t_full = t_full.at[:, 1:num_cams].set(t.T.astype(jnp.float32))

    # (N,4,4) -> (16, Npad) with camera on lanes: init_flat[4i+j, cam] = init[cam,i,j]
    init_flat = jnp.transpose(init_c2w.astype(jnp.float32), (1, 2, 0)).reshape(16, num_cams)
    init_flat = jnp.pad(init_flat, ((0, 0), (0, n_pad - num_cams)))

    out_flat = pl.pallas_call(
        _global_pose_kernel,
        out_shape=jax.ShapeDtypeStruct((16, n_pad), jnp.float32),
        in_specs=[
            pl.BlockSpec(memory_space=pltpu.MemorySpace.VMEM),
            pl.BlockSpec(memory_space=pltpu.MemorySpace.VMEM),
            pl.BlockSpec(memory_space=pltpu.MemorySpace.VMEM),
        ],
        out_specs=pl.BlockSpec(memory_space=pltpu.MemorySpace.VMEM),
    )(r_full, t_full, init_flat)

    # (16, Npad) -> (N, 4, 4)
    return jnp.transpose(out_flat[:, :num_cams].reshape(4, 4, num_cams), (2, 0, 1))


@jax.jit
def global_pose_forward(cam_id_arr, r, t, init_c2w):
    """forward(cam_id): index the batched Pallas kernel's result.

    Per perf guidance, launching a kernel for a single (4,4) result is pure
    overhead; the batched kernel computes every camera in one lane-dense step.
    """
    all_poses = global_pose_all(r, t, init_c2w)
    return jnp.take(all_poses, cam_id_arr[0], axis=0)


# ----------------------- pure-JAX reference (for checking) -----------------------
def _ref_quad2rotation(q):
    qr, qi, qj, qk = q[0], q[1], q[2], q[3]
    two_s = 2.0 / jnp.sum(q * q)
    return jnp.array(
        [
            [1 - two_s * (qj**2 + qk**2), two_s * (qi * qj - qk * qr), two_s * (qi * qk + qj * qr)],
            [two_s * (qi * qj + qk * qr), 1 - two_s * (qi**2 + qk**2), two_s * (qj * qk - qi * qr)],
            [two_s * (qi * qk - qj * qr), two_s * (qj * qk + qi * qr), 1 - two_s * (qi**2 + qj**2)],
        ],
        dtype=jnp.float32,
    )


def _ref_forward(cam_id, r, t, init_c2w):
    if cam_id == 0:
        c2w = jnp.eye(4, dtype=jnp.float32)
    else:
        R = _ref_quad2rotation(r[cam_id - 1])
        RT = jnp.concatenate([R, t[cam_id - 1][:, None]], axis=1)
        homo = jnp.array([[0.0, 0.0, 0.0, 1.0]], dtype=jnp.float32)
        c2w = jnp.concatenate([RT, homo], axis=0)
    return c2w @ init_c2w[cam_id]


if __name__ == "__main__":
    # GlobalPose(num_cams, init_c2w, device); requires num_cams > 1 for r/t params.
    num_cams = 4
    key = jax.random.PRNGKey(0)
    k1, k2, k3 = jax.random.split(key, 3)

    init_c2w = jax.random.normal(k1, (num_cams, 4, 4), dtype=jnp.float32)
    init_c2w = init_c2w.at[:, 3, :].set(jnp.array([0.0, 0.0, 0.0, 1.0], jnp.float32))

    # Parameters as in __init__ (identity quaternion, zero translation), plus a
    # small deterministic perturbation so the quaternion->rotation path is
    # actually exercised.
    base_quat = jnp.tile(jnp.array([[1.0, 0.0, 0.0, 0.0]], jnp.float32), (num_cams - 1, 1))
    r = base_quat + 0.1 * jax.random.normal(k2, (num_cams - 1, 4), dtype=jnp.float32)
    t = 0.1 * jax.random.normal(k3, (num_cams - 1, 3), dtype=jnp.float32)

    ok = True

    # Batched kernel (one lane-dense launch for all cameras, as in get_pose()).
    all_poses = jax.block_until_ready(global_pose_all(r, t, init_c2w))

    for cam_id in range(num_cams):
        ref = _ref_forward(cam_id, r, t, init_c2w)

        out_b = all_poses[cam_id]
        if not jnp.allclose(out_b, ref, atol=1e-5, rtol=1e-4):
            ok = False
            print(f"[batched] mismatch at cam_id={cam_id}\nkernel=\n{out_b}\nref=\n{ref}")

        # forward(cam_id) semantics (indexes the batched Pallas result).
        out_f = jax.block_until_ready(
            global_pose_forward(jnp.array([cam_id], jnp.int32), r, t, init_c2w)
        )
        if not jnp.allclose(out_f, ref, atol=1e-5, rtol=1e-4):
            ok = False
            print(f"[forward] mismatch at cam_id={cam_id}\nkernel=\n{out_f}\nref=\n{ref}")

    if ok:
        print("KERNEL_OK")
</pallas_src>

<mosaic_0001>
module attributes {stable_mosaic.version = 11 : i64} {
  func.func @_global_pose_kernel(%arg0: memref<4x128xf32, #tpu.memory_space<vmem>>, %arg1: memref<3x128xf32, #tpu.memory_space<vmem>>, %arg2: memref<16x128xf32, #tpu.memory_space<vmem>>, %arg3: memref<16x128xf32, #tpu.memory_space<vmem>>) attributes {dimension_semantics = [], scalar_prefetch = 0 : i64, scratch_operands = 0 : i64, tpu.core_type = #tpu.core_type<tc>} {
    %c0 = arith.constant 0 : index
    %c0_0 = arith.constant 0 : index
    %0 = vector.load %arg0[%c0, %c0_0] : memref<4x128xf32, #tpu.memory_space<vmem>>, vector<1x128xf32>
    %c1 = arith.constant 1 : index
    %c0_1 = arith.constant 0 : index
    %1 = vector.load %arg0[%c1, %c0_1] : memref<4x128xf32, #tpu.memory_space<vmem>>, vector<1x128xf32>
    %c2 = arith.constant 2 : index
    %c0_2 = arith.constant 0 : index
    %2 = vector.load %arg0[%c2, %c0_2] : memref<4x128xf32, #tpu.memory_space<vmem>>, vector<1x128xf32>
    %c3 = arith.constant 3 : index
    %c0_3 = arith.constant 0 : index
    %3 = vector.load %arg0[%c3, %c0_3] : memref<4x128xf32, #tpu.memory_space<vmem>>, vector<1x128xf32>
    %c0_4 = arith.constant 0 : index
    %c0_5 = arith.constant 0 : index
    %4 = vector.load %arg1[%c0_4, %c0_5] : memref<3x128xf32, #tpu.memory_space<vmem>>, vector<1x128xf32>
    %c1_6 = arith.constant 1 : index
    %c0_7 = arith.constant 0 : index
    %5 = vector.load %arg1[%c1_6, %c0_7] : memref<3x128xf32, #tpu.memory_space<vmem>>, vector<1x128xf32>
    %c2_8 = arith.constant 2 : index
    %c0_9 = arith.constant 0 : index
    %6 = vector.load %arg1[%c2_8, %c0_9] : memref<3x128xf32, #tpu.memory_space<vmem>>, vector<1x128xf32>
    %7 = arith.mulf %0, %0 : vector<1x128xf32>
    %8 = arith.mulf %1, %1 : vector<1x128xf32>
    %9 = arith.addf %7, %8 : vector<1x128xf32>
    %10 = arith.mulf %2, %2 : vector<1x128xf32>
    %11 = arith.addf %9, %10 : vector<1x128xf32>
    %12 = arith.mulf %3, %3 : vector<1x128xf32>
    %13 = arith.addf %11, %12 : vector<1x128xf32>
    %cst = arith.constant 2.000000e+00 : f32
    %14 = vector.broadcast %cst : f32 to vector<1x128xf32>
    %15 = arith.divf %14, %13 : vector<1x128xf32>
    %16 = arith.mulf %2, %2 : vector<1x128xf32>
    %17 = arith.mulf %3, %3 : vector<1x128xf32>
    %18 = arith.addf %16, %17 : vector<1x128xf32>
    %19 = arith.mulf %15, %18 : vector<1x128xf32>
    %cst_10 = arith.constant 1.000000e+00 : f32
    %20 = vector.broadcast %cst_10 : f32 to vector<1x128xf32>
    %21 = arith.subf %20, %19 : vector<1x128xf32>
    %22 = arith.mulf %1, %2 : vector<1x128xf32>
    %23 = arith.mulf %3, %0 : vector<1x128xf32>
    %24 = arith.subf %22, %23 : vector<1x128xf32>
    %25 = arith.mulf %15, %24 : vector<1x128xf32>
    %26 = arith.mulf %1, %3 : vector<1x128xf32>
    %27 = arith.mulf %2, %0 : vector<1x128xf32>
    %28 = arith.addf %26, %27 : vector<1x128xf32>
    %29 = arith.mulf %15, %28 : vector<1x128xf32>
    %30 = arith.mulf %1, %2 : vector<1x128xf32>
    %31 = arith.mulf %3, %0 : vector<1x128xf32>
    %32 = arith.addf %30, %31 : vector<1x128xf32>
    %33 = arith.mulf %15, %32 : vector<1x128xf32>
    %34 = arith.mulf %1, %1 : vector<1x128xf32>
    %35 = arith.mulf %3, %3 : vector<1x128xf32>
    %36 = arith.addf %34, %35 : vector<1x128xf32>
    %37 = arith.mulf %15, %36 : vector<1x128xf32>
    %cst_11 = arith.constant 1.000000e+00 : f32
    %38 = vector.broadcast %cst_11 : f32 to vector<1x128xf32>
    %39 = arith.subf %38, %37 : vector<1x128xf32>
    %40 = arith.mulf %2, %3 : vector<1x128xf32>
    %41 = arith.mulf %1, %0 : vector<1x128xf32>
    %42 = arith.subf %40, %41 : vector<1x128xf32>
    %43 = arith.mulf %15, %42 : vector<1x128xf32>
    %44 = arith.mulf %1, %3 : vector<1x128xf32>
    %45 = arith.mulf %2, %0 : vector<1x128xf32>
    %46 = arith.subf %44, %45 : vector<1x128xf32>
    %47 = arith.mulf %15, %46 : vector<1x128xf32>
    %48 = arith.mulf %2, %3 : vector<1x128xf32>
    %49 = arith.mulf %1, %0 : vector<1x128xf32>
    %50 = arith.addf %48, %49 : vector<1x128xf32>
    %51 = arith.mulf %15, %50 : vector<1x128xf32>
    %52 = arith.mulf %1, %1 : vector<1x128xf32>
    %53 = arith.mulf %2, %2 : vector<1x128xf32>
    %54 = arith.addf %52, %53 : vector<1x128xf32>
    %55 = arith.mulf %15, %54 : vector<1x128xf32>
    %cst_12 = arith.constant 1.000000e+00 : f32
    %56 = vector.broadcast %cst_12 : f32 to vector<1x128xf32>
    %57 = arith.subf %56, %55 : vector<1x128xf32>
    %c0_13 = arith.constant 0 : index
    %c0_14 = arith.constant 0 : index
    %58 = vector.load %arg2[%c0_13, %c0_14] : memref<16x128xf32, #tpu.memory_space<vmem>>, vector<16x128xf32>
    %59 = vector.extract_strided_slice %58 {offsets = [0, 0], sizes = [4, 128], strides = [1, 1]} : vector<16x128xf32> to vector<4x128xf32>
    %60 = vector.extract_strided_slice %58 {offsets = [4, 0], sizes = [4, 128], strides = [1, 1]} : vector<16x128xf32> to vector<4x128xf32>
    %61 = vector.extract_strided_slice %58 {offsets = [8, 0], sizes = [4, 128], strides = [1, 1]} : vector<16x128xf32> to vector<4x128xf32>
    %62 = vector.extract_strided_slice %58 {offsets = [12, 0], sizes = [4, 128], strides = [1, 1]} : vector<16x128xf32> to vector<4x128xf32>
    %63 = vector.broadcast %21 : vector<1x128xf32> to vector<4x128xf32>
    %64 = arith.mulf %63, %59 : vector<4x128xf32>
    %65 = vector.broadcast %25 : vector<1x128xf32> to vector<4x128xf32>
    %66 = arith.mulf %65, %60 : vector<4x128xf32>
    %67 = arith.addf %64, %66 : vector<4x128xf32>
    %68 = vector.broadcast %29 : vector<1x128xf32> to vector<4x128xf32>
    %69 = arith.mulf %68, %61 : vector<4x128xf32>
    %70 = arith.addf %67, %69 : vector<4x128xf32>
    %71 = vector.broadcast %4 : vector<1x128xf32> to vector<4x128xf32>
    %72 = arith.mulf %71, %62 : vector<4x128xf32>
    %73 = arith.addf %70, %72 : vector<4x128xf32>
    %c0_15 = arith.constant 0 : index
    %c0_16 = arith.constant 0 : index
    %74 = vector.load %arg3[%c0_15, %c0_16] : memref<16x128xf32, #tpu.memory_space<vmem>>, vector<4x128xf32>
    tpu.vector_store %arg3[%c0_15, %c0_16], %73 {strides = array<i32>} : memref<16x128xf32, #tpu.memory_space<vmem>>, vector<4x128xf32>,
    %75 = vector.broadcast %33 : vector<1x128xf32> to vector<4x128xf32>
    %76 = arith.mulf %75, %59 : vector<4x128xf32>
    %77 = vector.broadcast %39 : vector<1x128xf32> to vector<4x128xf32>
    %78 = arith.mulf %77, %60 : vector<4x128xf32>
    %79 = arith.addf %76, %78 : vector<4x128xf32>
    %80 = vector.broadcast %43 : vector<1x128xf32> to vector<4x128xf32>
    %81 = arith.mulf %80, %61 : vector<4x128xf32>
    %82 = arith.addf %79, %81 : vector<4x128xf32>
    %83 = vector.broadcast %5 : vector<1x128xf32> to vector<4x128xf32>
    %84 = arith.mulf %83, %62 : vector<4x128xf32>
    %85 = arith.addf %82, %84 : vector<4x128xf32>
    %c4 = arith.constant 4 : index
    %c0_17 = arith.constant 0 : index
    %86 = vector.load %arg3[%c4, %c0_17] : memref<16x128xf32, #tpu.memory_space<vmem>>, vector<4x128xf32>
    tpu.vector_store %arg3[%c4, %c0_17], %85 {strides = array<i32>} : memref<16x128xf32, #tpu.memory_space<vmem>>, vector<4x128xf32>,
    %87 = vector.broadcast %47 : vector<1x128xf32> to vector<4x128xf32>
    %88 = arith.mulf %87, %59 : vector<4x128xf32>
    %89 = vector.broadcast %51 : vector<1x128xf32> to vector<4x128xf32>
    %90 = arith.mulf %89, %60 : vector<4x128xf32>
    %91 = arith.addf %88, %90 : vector<4x128xf32>
    %92 = vector.broadcast %57 : vector<1x128xf32> to vector<4x128xf32>
    %93 = arith.mulf %92, %61 : vector<4x128xf32>
    %94 = arith.addf %91, %93 : vector<4x128xf32>
    %95 = vector.broadcast %6 : vector<1x128xf32> to vector<4x128xf32>
    %96 = arith.mulf %95, %62 : vector<4x128xf32>
    %97 = arith.addf %94, %96 : vector<4x128xf32>
    %c8 = arith.constant 8 : index
    %c0_18 = arith.constant 0 : index
    %98 = vector.load %arg3[%c8, %c0_18] : memref<16x128xf32, #tpu.memory_space<vmem>>, vector<4x128xf32>
    tpu.vector_store %arg3[%c8, %c0_18], %97 {strides = array<i32>} : memref<16x128xf32, #tpu.memory_space<vmem>>, vector<4x128xf32>,
    %c12 = arith.constant 12 : index
    %c0_19 = arith.constant 0 : index
    %99 = vector.load %arg3[%c12, %c0_19] : memref<16x128xf32, #tpu.memory_space<vmem>>, vector<4x128xf32>
    tpu.vector_store %arg3[%c12, %c0_19], %62 {strides = array<i32>} : memref<16x128xf32, #tpu.memory_space<vmem>>, vector<4x128xf32>,
    return
  }
}

</mosaic_0001>

<llo_original>
// kernel: global_pose_all.1
$region0: #{global_pose_all.1}
  #allocation0 [shape = 'u32[]', space=smem, size = 0x4, offset = 0x4, fixed_abs, tag = 'smem constant byte address 0x4 - core index']
  #allocation1 [shape = 'u32[144,128]{1,0:T(1,128)}', space=vmem, size = 0x12000, scoped, tag = 'internal scratch']
  %s0 = inlined_call_operand.vmem [shape: f32[4,128], index: 0, kind: input, shape index: {}]
  %s1 = inlined_call_operand.vmem [shape: f32[3,128], index: 1, kind: input, shape index: {}]
  %s2 = inlined_call_operand.vmem [shape: f32[16,128], index: 2, kind: input, shape index: {}]
  %s3 = inlined_call_operand.vmem [shape: f32[16,128], index: 3, kind: output, shape index: {}]
  %s4 = sld [smem:[#allocation0]]
  $region22: #{global_pose_all.1} parent=0
    _
  %s6 = ssub.s32 1, %s4
  %s7 = scalar_select 0, %s6, %s4
  // Predicated region
  $region2: #{global_pose_all.1} parent=0 // pred_check
    _
  $region3: #{global_pose_all.1} parent=0 // pred_check_branch
    %9 = sbr.rel (0) target = $region5
  $region4: #{global_pose_all.1} parent=0 // pred_region
    _
  $region5: #{global_pose_all.1} parent=0 // pred_fallthru
    _
  // Predicated region
  $region6: #{global_pose_all.1} parent=0 // pred_check
    _
  $region7: #{global_pose_all.1} parent=0 // pred_check_branch
    %11 = sbr.rel (0) target = $region9
  $region8: #{global_pose_all.1} parent=0 // pred_region
    _
  $region9: #{global_pose_all.1} parent=0 // pred_fallthru
    _
  // Predicated region
  $region10: #{global_pose_all.1} parent=0 // pred_check
    _
  $region11: #{global_pose_all.1} parent=0 // pred_check_branch
    %13 = sbr.rel (0) target = $region13
  $region12: #{global_pose_all.1} parent=0 // pred_region
    _
  $region13: #{global_pose_all.1} parent=0 // pred_fallthru
    _
  %v14 = vld [vmem:[%s0] sm:$0x1]
  %v15 = vld [vmem:[%s0 + $0x1] sm:$0x1]
  %v16 = vld [vmem:[%s0 + $0x2] sm:$0x1]
  %v17 = vld [vmem:[%s0 + $0x3] sm:$0x1]
  %v18 = vld [vmem:[%s1] sm:$0x1]
  %v19 = vld [vmem:[%s1 + $0x1] sm:$0x1]
  %v20 = vld [vmem:[%s1 + $0x2] sm:$0x1]
  %v21 = vmul.f32 %v14, %v14
  %v22 = vmul.f32 %v15, %v15
  %v23 = vadd.f32 %v21, %v22
  %v24 = vmul.f32 %v16, %v16
  %v25 = vadd.f32 %v23, %v24
  %v26 = vmul.f32 %v17, %v17
  %v27 = vadd.f32 %v25, %v26
  %v28 = vrcp.pop %v27
  %v29 = vmul.f32 2.0, %v28
  %v30 = vadd.f32 %v24, %v26
  %v31 = vmul.f32 %v29, %v30
  %v32 = vsub.f32 1.0, %v31
  %v33 = vmul.f32 %v15, %v16
  %v34 = vmul.f32 %v17, %v14
  %v35 = vsub.f32 %v33, %v34
  %v36 = vmul.f32 %v29, %v35
  %v37 = vmul.f32 %v15, %v17
  %v38 = vmul.f32 %v16, %v14
  %v39 = vadd.f32 %v37, %v38
  %v40 = vmul.f32 %v29, %v39
  %v41 = vadd.f32 %v33, %v34
  %v42 = vmul.f32 %v29, %v41
  %v43 = vadd.f32 %v22, %v26
  %v44 = vmul.f32 %v29, %v43
  %v45 = vsub.f32 1.0, %v44
  %v46 = vmul.f32 %v16, %v17
  %v47 = vmul.f32 %v15, %v14
  %v48 = vsub.f32 %v46, %v47
  %v49 = vmul.f32 %v29, %v48
  %v50 = vsub.f32 %v37, %v38
  %v51 = vmul.f32 %v29, %v50
  %v52 = vadd.f32 %v46, %v47
  %v53 = vmul.f32 %v29, %v52
  %v54 = vadd.f32 %v22, %v24
  %v55 = vmul.f32 %v29, %v54
  %v56 = vsub.f32 1.0, %v55
  %v57 = vld [vmem:[%s2] sm:$0xff]
  %v58 = vld [vmem:[%s2 + $0x8] sm:$0xff]
  %v59 = vlaneseq
  %v60 = vshrl.u32 %v59, 7
  %v61 = vsub.s32 0, %v60
  %v62 = vrot.slane %v32, %v61
  %v63 = vmul.f32 %v62, %v57
  %v64 = vlaneseq
  %v65 = vshrl.u32 %v64, 7
  %v66 = vsub.s32 0, %v65
  %v67 = vrot.slane %v36, %v66
  %v68 = vmul.f32 %v67, %v57
  %v70 = vrot.slane %v68, 4
  %v72 = vadd.f32 %v63, %v70
  %v73 = vlaneseq
  %v74 = vshrl.u32 %v73, 7
  %v75 = vsub.s32 0, %v74
  %v76 = vrot.slane %v40, %v75
  %v77 = vmul.f32 %v76, %v58
  %v78 = vadd.f32 %v72, %v77
  %v79 = vlaneseq
  %v80 = vshrl.u32 %v79, 7
  %v81 = vsub.s32 0, %v80
  %v82 = vrot.slane %v18, %v81
  %v83 = vmul.f32 %v82, %v58
  %v85 = vrot.slane %v83, 4
  %v87 = vadd.f32 %v78, %v85
  %88 = vst [vmem:[%s3] sm:$0xf] %v87
  %v89 = vlaneseq
  %v90 = vshrl.u32 %v89, 7
  %v91 = vsub.s32 0, %v90
  %v92 = vrot.slane %v42, %v91
  %v93 = vmul.f32 %v92, %v57
  %v94 = vlaneseq
  %v95 = vshrl.u32 %v94, 7
  %v96 = vsub.s32 0, %v95
  %v97 = vrot.slane %v45, %v96
  %v98 = vmul.f32 %v97, %v57
  %v100 = vrot.slane %v98, 4
  %v102 = vadd.f32 %v93, %v100
  %v103 = vlaneseq
  %v104 = vshrl.u32 %v103, 7
  %v105 = vsub.s32 0, %v104
  %v106 = vrot.slane %v49, %v105
  %v107 = vmul.f32 %v106, %v58
  %v108 = vadd.f32 %v102, %v107
  %v109 = vlaneseq
  %v110 = vshrl.u32 %v109, 7
  %v111 = vsub.s32 0, %v110
  %v112 = vrot.slane %v19, %v111
  %v113 = vmul.f32 %v112, %v58
  %v115 = vrot.slane %v113, 4
  %v117 = vadd.f32 %v108, %v115
  %118 = vst [vmem:[%s3 + $0x4] sm:$0xf] %v117
  %v119 = vlaneseq
  %v120 = vshrl.u32 %v119, 7
  %v121 = vsub.s32 0, %v120
  %v122 = vrot.slane %v51, %v121
  %v123 = vmul.f32 %v122, %v57
  %v124 = vlaneseq
  %v125 = vshrl.u32 %v124, 7
  %v126 = vsub.s32 0, %v125
  %v127 = vrot.slane %v53, %v126
  %v128 = vmul.f32 %v127, %v57
  %v130 = vrot.slane %v128, 4
  %v132 = vadd.f32 %v123, %v130
  %v133 = vlaneseq
  %v134 = vshrl.u32 %v133, 7
  %v135 = vsub.s32 0, %v134
  %v136 = vrot.slane %v56, %v135
  %v137 = vmul.f32 %v136, %v58
  %v138 = vadd.f32 %v132, %v137
  %v139 = vlaneseq
  %v140 = vshrl.u32 %v139, 7
  %v141 = vsub.s32 0, %v140
  %v142 = vrot.slane %v20, %v141
  %v143 = vmul.f32 %v142, %v58
  %v145 = vrot.slane %v143, 4
  %v147 = vadd.f32 %v138, %v145
  %148 = vst [vmem:[%s3 + $0x8] sm:$0xf] %v147
  %149 = vst [vmem:[%s3 + $0x8] sm:$0xf0] %v58
  // Predicated region
  $region14: #{global_pose_all.1} parent=0 // pred_check
    _
  $region15: #{global_pose_all.1} parent=0 // pred_check_branch
    %151 = sbr.rel (0) target = $region17
  $region16: #{global_pose_all.1} parent=0 // pred_region
    _
  $region17: #{global_pose_all.1} parent=0 // pred_fallthru
    _
  // Predicated region
  $region18: #{global_pose_all.1} parent=0 // pred_check
    _
  $region19: #{global_pose_all.1} parent=0 // pred_check_branch
    %153 = sbr.rel (0) target = $region21
  $region20: #{global_pose_all.1} parent=0 // pred_region
    _
  $region21: #{global_pose_all.1} parent=0 // pred_fallthru
    _

</llo_original>
